<compile_context>
chip_gen: v7x
topology: tpu7x:2x2x1
jax: 0.10.0
libtpu: 0.0.40
codegen_flags: <defaults>
</compile_context>

<pallas_src>
import numpy as np
import jax
import jax.numpy as jnp
from jax.experimental import pallas as pl
from jax.experimental.pallas import tpu as pltpu

# ---- hyperparameters implied by the module __init__ -------------------------------
NFEAT     = 16     # nfeat (== nhidden, required by the original code path)
NHIDDEN   = 16     # nhidden
NPRED     = 1      # npred / pred_len
HID_DIM   = 64     # LS_GNN.hid_dim
GNN_OUT   = 13     # LS_GNN.gnn_out
GNN_OUT_P = 16     # padded to sublane multiple
E_H       = 32     # GraphGNN edge_mlp hidden width
E_OUT     = 30     # GraphGNN edge_mlp output width
E_OUT_P   = 32     # padded to sublane multiple
OUT_DIM   = 1      # LS_GNN.out_dim
OUT_PAD   = 128    # lane-dense padded output width (col 0 holds the real output)
GATE_PAD  = 128    # each GRU gate padded to a full vreg lane width
GATES_W   = 3 * GATE_PAD

# ---- packed weight-slab row offsets (all multiples of 16 -> bf16 sublane-tile aligned)
W_GCN_R = 0
W_1_R   = W_GCN_R + NFEAT        # 16   [w1s | w1t]          (NHIDDEN, 2*E_H)
W_2_R   = W_1_R + NHIDDEN        # 32   w2 padded            (E_H, E_OUT_P)
W_3_R   = W_2_R + E_H            # 64   w3 padded            (E_OUT_P, GNN_OUT_P)
W_G_R   = W_3_R + E_OUT_P        # 96   [wrg|..|wzg|..|wng]  (GNN_OUT_P, 384)
W_X_R   = W_G_R + GNN_OUT_P      # 112  [wrx|..|wzx|..|wnx]  (NHIDDEN, 384)
W_O_R   = W_X_R + NHIDDEN        # 128  fc_out padded        (HID_DIM, OUT_PAD)
W_ROWS  = W_O_R + HID_DIM        # 192
W_COLS  = GATES_W                # 384


def _round_up(a, m):
    return ((a + m - 1) // m) * m


def _make_kernel(BN, BE_P):
    GCAT_R = BN              # row offset of the fused [gsrc|gtgt] gather matrix
    GDIF_R = BN + BE_P       # row offset of the combined-scatter matrix

    def kernel(x_ref, g_ref, w_ref, b_ref, ebias_ref, out_ref):
        f32, bf16 = jnp.float32, jnp.bfloat16

        def bdot(a, b):
            # bf16 MXU inputs, f32 accumulation; elementwise math stays f32 (v5e-safe).
            return jnp.dot(a.astype(bf16), b.astype(bf16), preferred_element_type=f32)

        bias = b_ref[...]                                       # (8, 128) f32, one load
        b2   = bias[0:1, 0:E_OUT_P]
        b3   = bias[1:2, 0:GNN_OUT_P]
        br   = bias[2:3, 0:HID_DIM]
        bz   = bias[3:4, 0:HID_DIM]
        bnx  = bias[4:5, 0:HID_DIM]
        bhn  = bias[5:6, 0:HID_DIM]
        bo   = bias[6:7, :]

        x = x_ref[...]                                          # (BN, NFEAT) f32

        # -------- GCNLayer: relu(adj @ (x @ W)), adj block-diagonal over folded batch --
        xw  = bdot(x, w_ref[W_GCN_R:W_GCN_R + NFEAT, 0:NHIDDEN])
        gcn = jnp.maximum(bdot(g_ref[0:BN, 0:BN], xw), 0.0)     # (BN, NHIDDEN) f32
        # TODO(synk): F.dropout(x, p, training=True) has no deterministic Pallas
        #             equivalent; implemented as identity (inference mode).

        # -------- GraphGNN edge MLP (layer-1 re-associated, gathers fused to ONE matmul)
        pspt  = bdot(gcn, w_ref[W_1_R:W_1_R + NHIDDEN, 0:2 * E_H])        # [gcn@W1s | gcn@W1t]
        ps_pt = jnp.concatenate([pspt[:, 0:E_H], pspt[:, E_H:2 * E_H]], axis=0)   # (2*BN, E_H)
        h1 = jax.nn.sigmoid(
            bdot(g_ref[GCAT_R:GCAT_R + BE_P, 0:2 * BN], ps_pt) + ebias_ref[...])  # (BE_P, E_H)
        e  = jax.nn.sigmoid(bdot(h1, w_ref[W_2_R:W_2_R + E_H, 0:E_OUT_P]) + b2)   # (BE_P, E_OUT_P)
        # scatter_add(+e, tgt) + scatter_add(-e, src) pre-combined into one matrix
        agg    = bdot(g_ref[GDIF_R:GDIF_R + BN, 0:BE_P], e)                       # (BN, E_OUT_P)
        xn_gnn = jax.nn.sigmoid(bdot(agg, w_ref[W_3_R:W_3_R + E_OUT_P, 0:GNN_OUT_P]) + b3)

        # -------- GRUCell with h0 == 0: 6 gate matmuls fused into 2 (128-lane gates) ---
        gates = (bdot(xn_gnn, w_ref[W_G_R:W_G_R + GNN_OUT_P, :])
                 + bdot(gcn, w_ref[W_X_R:W_X_R + NHIDDEN, :]))                    # (BN, 384) f32
        r = jax.nn.sigmoid(gates[:, 0:HID_DIM] + br)
        z = jax.nn.sigmoid(gates[:, GATE_PAD:GATE_PAD + HID_DIM] + bz)
        n = jnp.tanh(gates[:, 2 * GATE_PAD:2 * GATE_PAD + HID_DIM] + bnx + r * bhn)
        hy = (1.0 - z) * n                                                        # (BN, HID_DIM)

        # -------- fc_out folded into a 128-lane padded matmul (lane-dense store) -------
        out_ref[...] = bdot(hy, w_ref[W_O_R:W_O_R + HID_DIM, 0:OUT_PAD]) + bo

    return kernel


def init_params(key):
    keys = jax.random.split(key, 16)
    s = 0.2

    def rnd(k, shape):
        return s * jax.random.normal(k, shape, dtype=jnp.float32)

    it = iter(keys)
    p = {}
    p["wgcn"] = rnd(next(it), (NFEAT, NHIDDEN))            # GCNLayer.weight (bias=False)
    # GraphGNN.edge_mlp = Linear(2*in_dim+1, 32), Sigmoid, Linear(32, 30), Sigmoid
    p["w1s"] = rnd(next(it), (NHIDDEN, E_H))               # rows for node_src
    p["w1t"] = rnd(next(it), (NHIDDEN, E_H))               # rows for node_target
    p["w1w"] = rnd(next(it), (1, E_H))                     # row for edge weight
    p["b1"]  = rnd(next(it), (1, E_H))
    p["w2"]  = rnd(next(it), (E_H, E_OUT))
    p["b2"]  = rnd(next(it), (1, E_OUT))
    # GraphGNN.node_mlp = Linear(30, gnn_out), Sigmoid
    p["w3"]  = rnd(next(it), (E_OUT, GNN_OUT))
    p["b3"]  = rnd(next(it), (1, GNN_OUT))
    # GRUCell(in_dim + gnn_out, hid_dim): x2h / h2h as (in, 3*hid) matrices
    p["wxg"] = rnd(next(it), (GNN_OUT, 3 * HID_DIM))       # rows for xn_gnn part of cat
    p["wxx"] = rnd(next(it), (NHIDDEN, 3 * HID_DIM))       # rows for x part of cat
    p["bx"]  = rnd(next(it), (1, 3 * HID_DIM))
    p["wh"]  = rnd(next(it), (HID_DIM, 3 * HID_DIM))       # only reaches output via bh (h0=0)
    p["bh"]  = rnd(next(it), (1, 3 * HID_DIM))
    # fc_out = Linear(hid_dim, 1)
    p["wo"]  = rnd(next(it), (HID_DIM, OUT_DIM))
    p["bo"]  = rnd(next(it), (1, OUT_DIM))
    return p


def build_ls_gnn_gcn(adj, edge_src, edge_tgt, edge_w, params, B, N):
    """One-time host prep (graph structure + weight packing); returns a jitted forward(x)."""
    BN = B * N
    E = int(edge_src.shape[0])
    BE = B * E
    assert E > 0
    assert BN % 16 == 0, "batch*station_num must be a multiple of 16 (bf16 sublane tile)"
    BE_P  = _round_up(BE, 16)
    GCOLS = _round_up(max(2 * BN, BE_P), 128)
    GROWS = BN + BE_P + BN

    f32 = np.float32
    adj_np = np.asarray(adj, f32)
    src_np = np.asarray(edge_src)
    tgt_np = np.asarray(edge_tgt)
    ew_np  = np.asarray(edge_w, f32)
    eye_b  = np.eye(B, dtype=f32)
    p = {k: np.asarray(v, f32) for k, v in params.items()}

    # ---- graph-structure slab (done once; bf16 is exact for the 0/±1 gather entries) --
    adj_blk = np.kron(eye_b, adj_np)                                   # (BN, BN) block-diag
    gsrc = np.zeros((E, N), f32); gsrc[np.arange(E), src_np] = 1.0
    gtgt = np.zeros((E, N), f32); gtgt[np.arange(E), tgt_np] = 1.0
    gsrc_f = np.kron(eye_b, gsrc)                                      # (BE, BN)
    gtgt_f = np.kron(eye_b, gtgt)                                      # (BE, BN)
    g_cat  = np.concatenate([gsrc_f, gtgt_f], axis=1)                  # (BE, 2*BN) fused gather
    gdiff  = (gtgt_f - gsrc_f).T                                       # (BN, BE) combined scatter
    # TODO(synk): the kron block-diag wastes O(B) MXU FLOPs / O(B^2) bytes; fine at toy
    #             sizes, switch to a batch grid axis once B*N is non-toy (v7x VMEM).
    graph = np.zeros((GROWS, GCOLS), f32)
    graph[0:BN, 0:BN] = adj_blk
    graph[BN:BN + BE, 0:2 * BN] = g_cat
    graph[BN + BE_P:BN + BE_P + BN, 0:BE] = gdiff
    graph_slab = jnp.asarray(graph, dtype=jnp.bfloat16)

    # ---- edge-constant bias of edge_mlp layer 1 (ew*w1w + b1), hoisted & batch-tiled ---
    ebias = np.zeros((BE_P, E_H), f32)
    ebias[0:BE] = np.tile(ew_np[:, None] * p["w1w"] + p["b1"], (B, 1))
    ebias_slab = jnp.asarray(ebias)

    # ---- packed bf16 weight slab --------------------------------------------------------
    W = np.zeros((W_ROWS, W_COLS), f32)
    W[W_GCN_R:W_GCN_R + NFEAT, 0:NHIDDEN]  = p["wgcn"]
    W[W_1_R:W_1_R + NHIDDEN, 0:E_H]        = p["w1s"]
    W[W_1_R:W_1_R + NHIDDEN, E_H:2 * E_H]  = p["w1t"]
    W[W_2_R:W_2_R + E_H, 0:E_OUT]          = p["w2"]      # cols 30..31 stay zero
    W[W_3_R:W_3_R + E_OUT, 0:GNN_OUT]      = p["w3"]      # zero pad rows/cols kill pad garbage
    for g in range(3):                                    # r, z, n gates, 128-lane padded each
        W[W_G_R:W_G_R + GNN_OUT, g * GATE_PAD:g * GATE_PAD + HID_DIM] = \
            p["wxg"][:, g * HID_DIM:(g + 1) * HID_DIM]
        W[W_X_R:W_X_R + NHIDDEN, g * GATE_PAD:g * GATE_PAD + HID_DIM] = \
            p["wxx"][:, g * HID_DIM:(g + 1) * HID_DIM]
    W[W_O_R:W_O_R + HID_DIM, 0:OUT_DIM] = p["wo"]
    w_slab = jnp.asarray(W, dtype=jnp.bfloat16)

    # ---- packed f32 bias slab (GRU h0 == 0 folding: bh_r/bh_i into br/bz) ---------------
    Bm = np.zeros((8, 128), f32)
    Bm[0, 0:E_OUT]   = p["b2"][0]
    Bm[1, 0:GNN_OUT] = p["b3"][0]
    bx, bh = p["bx"][0], p["bh"][0]
    Bm[2, 0:HID_DIM] = bx[0:HID_DIM] + bh[0:HID_DIM]                         # br (bh_r folded)
    Bm[3, 0:HID_DIM] = bx[HID_DIM:2 * HID_DIM] + bh[HID_DIM:2 * HID_DIM]     # bz (bh_i folded)
    Bm[4, 0:HID_DIM] = bx[2 * HID_DIM:3 * HID_DIM]                           # bnx
    Bm[5, 0:HID_DIM] = bh[2 * HID_DIM:3 * HID_DIM]                           # bhn (scaled by r)
    Bm[6, 0:OUT_DIM] = p["bo"][0]
    b_slab = jnp.asarray(Bm)

    kernel = _make_kernel(BN, BE_P)

    def full_spec(shape):
        nd = len(shape)
        return pl.BlockSpec(shape, lambda i, _n=nd: (0,) * _n)

    pallas_fn = pl.pallas_call(
        kernel,
        grid=(1,),                                   # batch folded into rows: single invocation
        in_specs=[full_spec((BN, NFEAT)),
                  full_spec(graph_slab.shape),
                  full_spec(w_slab.shape),
                  full_spec(b_slab.shape),
                  full_spec(ebias_slab.shape)],
        out_specs=pl.BlockSpec((BN, OUT_PAD), lambda i: (0, 0)),
        out_shape=jax.ShapeDtypeStruct((BN, OUT_PAD), jnp.float32),
        compiler_params=pltpu.CompilerParams(dimension_semantics=("arbitrary",)),
    )

    @jax.jit
    def forward(x):
        x_flat = x.reshape(BN, NFEAT).astype(jnp.float32)
        out128 = pallas_fn(x_flat, graph_slab, w_slab, b_slab, ebias_slab)
        # LS_GNN stacks the per-step predictions on dim=1; npred == 1 here.
        return out128[:, :OUT_DIM].reshape(B, N, OUT_DIM)[:, None, :, :]   # (B, NPRED, N, 1)

    return forward


def reference_forward(x, adj, edge_src, edge_tgt, edge_w, p):
    """Pure-JAX f32 reference mirroring the PyTorch semantics (for correctness check)."""
    B, N, F = x.shape
    E = edge_src.shape[0]
    gcn = jax.nn.relu(jnp.einsum("ij,bjk->bik", adj, x @ p["wgcn"]))
    node_src = gcn[:, edge_src]
    node_tgt = gcn[:, edge_tgt]
    ew = jnp.broadcast_to(edge_w[None, :, None], (B, E, 1))
    h1 = jax.nn.sigmoid(node_src @ p["w1s"] + node_tgt @ p["w1t"] + ew * p["w1w"] + p["b1"])
    e = jax.nn.sigmoid(h1 @ p["w2"] + p["b2"])
    out_add = jnp.zeros((B, N, E_OUT), jnp.float32).at[:, edge_tgt].add(e)
    out_sub = jnp.zeros((B, N, E_OUT), jnp.float32).at[:, edge_src].add(-e)
    xn_gnn = jax.nn.sigmoid((out_add + out_sub) @ p["w3"] + p["b3"])
    h_prev = jnp.zeros((B, N, HID_DIM), jnp.float32)
    gate_x = xn_gnn @ p["wxg"] + gcn @ p["wxx"] + p["bx"]
    gate_h = h_prev @ p["wh"] + p["bh"]
    i_r, i_i, i_n = jnp.split(gate_x, 3, axis=-1)
    h_r, h_i, h_n = jnp.split(gate_h, 3, axis=-1)
    r = jax.nn.sigmoid(i_r + h_r)
    z = jax.nn.sigmoid(i_i + h_i)
    n = jnp.tanh(i_n + r * h_n)
    hy = n + z * (h_prev - n)
    out = hy @ p["wo"] + p["bo"]
    return out[:, None, :, :]


if __name__ == "__main__":
    B, N = 2, 8  # batch_size, station_num
    key = jax.random.PRNGKey(0)
    k_x, k_adj, k_par = jax.random.split(key, 3)

    x = jax.random.normal(k_x, (B, N, NFEAT), dtype=jnp.float32)
    adj_raw = jax.random.uniform(k_adj, (N, N), dtype=jnp.float32)
    adj = jnp.where(adj_raw > 0.35, adj_raw, 0.0)

    # dense_to_sparse on host (row-major nonzero, same ordering as torch.nonzero)
    adj_np = np.asarray(adj)
    src_np, tgt_np = np.nonzero(adj_np)
    assert src_np.size > 0
    edge_src = jnp.asarray(src_np, dtype=jnp.int32)
    edge_tgt = jnp.asarray(tgt_np, dtype=jnp.int32)
    edge_w = jnp.asarray(adj_np[src_np, tgt_np], dtype=jnp.float32)

    params = init_params(k_par)

    # one-time build (all structure/weight packing hoisted out of the per-call path)
    forward = build_ls_gnn_gcn(adj, edge_src, edge_tgt, edge_w, params, B, N)

    out = jax.block_until_ready(forward(x))
    assert out.shape == (B, NPRED, N, OUT_DIM)

    ref = jax.block_until_ready(reference_forward(x, adj, edge_src, edge_tgt, edge_w, params))
    # bf16 MXU inputs (f32 accumulation) perturb slightly vs the pure-f32 reference.
    np.testing.assert_allclose(np.asarray(out), np.asarray(ref), rtol=2e-2, atol=2e-2)

    print("KERNEL_OK")
</pallas_src>

<mosaic_0001>
module attributes {stable_mosaic.version = 11 : i64} {
  func.func @kernel(%arg0: i32, %arg1: memref<16x16xf32, #tpu.memory_space<vmem>>, %arg2: memref<96x128xbf16, #tpu.memory_space<vmem>>, %arg3: memref<192x384xbf16, #tpu.memory_space<vmem>>, %arg4: memref<8x128xf32, #tpu.memory_space<vmem>>, %arg5: memref<64x32xf32, #tpu.memory_space<vmem>>, %arg6: memref<16x128xf32, #tpu.memory_space<vmem>>) attributes {dimension_semantics = [#tpu.dimension_semantics<arbitrary>], iteration_bounds = array<i64: 1>, scalar_prefetch = 0 : i64, scratch_operands = 0 : i64, tpu.core_type = #tpu.core_type<tc>, window_params = [{pipeline_mode = #tpu.pipeline_mode<synchronous>, transform_indices = @transform_0, window_bounds = array<i64: 16, 16>}, {pipeline_mode = #tpu.pipeline_mode<synchronous>, transform_indices = @transform_1, window_bounds = array<i64: 96, 128>}, {pipeline_mode = #tpu.pipeline_mode<synchronous>, transform_indices = @transform_2, window_bounds = array<i64: 192, 384>}, {pipeline_mode = #tpu.pipeline_mode<synchronous>, transform_indices = @transform_3, window_bounds = array<i64: 8, 128>}, {pipeline_mode = #tpu.pipeline_mode<synchronous>, transform_indices = @transform_4, window_bounds = array<i64: 64, 32>}, {pipeline_mode = #tpu.pipeline_mode<synchronous>, transform_indices = @transform_5, window_bounds = array<i64: 16, 128>}]} {
    %c0 = arith.constant 0 : index
    %c0_0 = arith.constant 0 : index
    %0 = vector.load %arg4[%c0, %c0_0] : memref<8x128xf32, #tpu.memory_space<vmem>>, vector<8x128xf32>
    %1 = vector.extract_strided_slice %0 {offsets = [0, 0], sizes = [1, 32], strides = [1, 1]} : vector<8x128xf32> to vector<1x32xf32>
    %2 = vector.extract_strided_slice %0 {offsets = [1, 0], sizes = [1, 16], strides = [1, 1]} : vector<8x128xf32> to vector<1x16xf32>
    %3 = vector.extract_strided_slice %0 {offsets = [2, 0], sizes = [1, 64], strides = [1, 1]} : vector<8x128xf32> to vector<1x64xf32>
    %4 = vector.extract_strided_slice %0 {offsets = [3, 0], sizes = [1, 64], strides = [1, 1]} : vector<8x128xf32> to vector<1x64xf32>
    %5 = vector.extract_strided_slice %0 {offsets = [4, 0], sizes = [1, 64], strides = [1, 1]} : vector<8x128xf32> to vector<1x64xf32>
    %6 = vector.extract_strided_slice %0 {offsets = [5, 0], sizes = [1, 64], strides = [1, 1]} : vector<8x128xf32> to vector<1x64xf32>
    %7 = vector.extract_strided_slice %0 {offsets = [6, 0], sizes = [1, 128], strides = [1, 1]} : vector<8x128xf32> to vector<1x128xf32>
    %c0_1 = arith.constant 0 : index
    %c0_2 = arith.constant 0 : index
    %8 = vector.load %arg1[%c0_1, %c0_2] : memref<16x16xf32, #tpu.memory_space<vmem>>, vector<16x16xf32>
    %c0_3 = arith.constant 0 : index
    %c0_4 = arith.constant 0 : index
    %9 = vector.load %arg3[%c0_3, %c0_4] : memref<192x384xbf16, #tpu.memory_space<vmem>>, vector<16x16xbf16>
    %10 = arith.truncf %8 : vector<16x16xf32> to vector<16x16xbf16>
    %cst = arith.constant dense<0.000000e+00> : vector<16x16xf32>
    %11 = tpu.matmul %10, %9, %cst {dimension_numbers = #tpu.dot_dimension_numbers<[1], [0], [0], [1], [0, 0, 1, 1], [], []>} : vector<16x16xbf16>, vector<16x16xbf16>, vector<16x16xf32> -> vector<16x16xf32>
    %c0_5 = arith.constant 0 : index
    %c0_6 = arith.constant 0 : index
    %12 = vector.load %arg2[%c0_5, %c0_6] : memref<96x128xbf16, #tpu.memory_space<vmem>>, vector<16x16xbf16>
    %13 = arith.truncf %11 : vector<16x16xf32> to vector<16x16xbf16>
    %cst_7 = arith.constant dense<0.000000e+00> : vector<16x16xf32>
    %14 = tpu.matmul %12, %13, %cst_7 {dimension_numbers = #tpu.dot_dimension_numbers<[1], [0], [0], [1], [0, 0, 1, 1], [], []>} : vector<16x16xbf16>, vector<16x16xbf16>, vector<16x16xf32> -> vector<16x16xf32>
    %cst_8 = arith.constant 0.000000e+00 : f32
    %15 = vector.broadcast %cst_8 : f32 to vector<16x16xf32>
    %16 = arith.maximumf %14, %15 : vector<16x16xf32>
    %c16 = arith.constant 16 : index
    %c0_9 = arith.constant 0 : index
    %17 = vector.load %arg3[%c16, %c0_9] : memref<192x384xbf16, #tpu.memory_space<vmem>>, vector<16x64xbf16>
    %18 = arith.truncf %16 : vector<16x16xf32> to vector<16x16xbf16>
    %cst_10 = arith.constant dense<0.000000e+00> : vector<16x64xf32>
    %19 = tpu.matmul %18, %17, %cst_10 {dimension_numbers = #tpu.dot_dimension_numbers<[1], [0], [0], [1], [0, 0, 1, 1], [], []>} : vector<16x16xbf16>, vector<16x64xbf16>, vector<16x64xf32> -> vector<16x64xf32>
    %20 = vector.extract_strided_slice %19 {offsets = [0, 0], sizes = [16, 32], strides = [1, 1]} : vector<16x64xf32> to vector<16x32xf32>
    %21 = vector.extract_strided_slice %19 {offsets = [0, 32], sizes = [16, 32], strides = [1, 1]} : vector<16x64xf32> to vector<16x32xf32>
    %22 = tpu.concatenate %20, %21 in 0 : vector<16x32xf32>, vector<16x32xf32> -> vector<32x32xf32>
    %c16_11 = arith.constant 16 : index
    %c0_12 = arith.constant 0 : index
    %23 = vector.load %arg2[%c16_11, %c0_12] : memref<96x128xbf16, #tpu.memory_space<vmem>>, vector<64x32xbf16>
    %24 = arith.truncf %22 : vector<32x32xf32> to vector<32x32xbf16>
    %cst_13 = arith.constant dense<0.000000e+00> : vector<64x32xf32>
    %25 = tpu.matmul %23, %24, %cst_13 {dimension_numbers = #tpu.dot_dimension_numbers<[1], [0], [0], [1], [0, 0, 1, 1], [], []>} : vector<64x32xbf16>, vector<32x32xbf16>, vector<64x32xf32> -> vector<64x32xf32>
    %c0_14 = arith.constant 0 : index
    %c0_15 = arith.constant 0 : index
    %26 = vector.load %arg5[%c0_14, %c0_15] : memref<64x32xf32, #tpu.memory_space<vmem>>, vector<64x32xf32>
    %27 = arith.addf %25, %26 : vector<64x32xf32>
    %28 = arith.negf %27 : vector<64x32xf32>
    %29 = math.exp %28 : vector<64x32xf32>
    %cst_16 = arith.constant 1.000000e+00 : f32
    %30 = vector.broadcast %cst_16 : f32 to vector<64x32xf32>
    %31 = arith.addf %30, %29 : vector<64x32xf32>
    %32 = arith.divf %30, %31 : vector<64x32xf32>
    %c32 = arith.constant 32 : index
    %c0_17 = arith.constant 0 : index
    %33 = vector.load %arg3[%c32, %c0_17] : memref<192x384xbf16, #tpu.memory_space<vmem>>, vector<32x32xbf16>
    %34 = arith.truncf %32 : vector<64x32xf32> to vector<64x32xbf16>
    %cst_18 = arith.constant dense<0.000000e+00> : vector<64x32xf32>
    %35 = tpu.matmul %34, %33, %cst_18 {dimension_numbers = #tpu.dot_dimension_numbers<[1], [0], [0], [1], [0, 0, 1, 1], [], []>} : vector<64x32xbf16>, vector<32x32xbf16>, vector<64x32xf32> -> vector<64x32xf32>
    %36 = vector.broadcast %1 : vector<1x32xf32> to vector<64x32xf32>
    %37 = arith.addf %35, %36 : vector<64x32xf32>
    %38 = arith.negf %37 : vector<64x32xf32>
    %39 = math.exp %38 : vector<64x32xf32>
    %cst_19 = arith.constant 1.000000e+00 : f32
    %40 = vector.broadcast %cst_19 : f32 to vector<64x32xf32>
    %41 = arith.addf %40, %39 : vector<64x32xf32>
    %42 = arith.divf %40, %41 : vector<64x32xf32>
    %c80 = arith.constant 80 : index
    %c0_20 = arith.constant 0 : index
    %43 = vector.load %arg2[%c80, %c0_20] : memref<96x128xbf16, #tpu.memory_space<vmem>>, vector<16x64xbf16>
    %44 = arith.truncf %42 : vector<64x32xf32> to vector<64x32xbf16>
    %cst_21 = arith.constant dense<0.000000e+00> : vector<16x32xf32>
    %45 = tpu.matmul %43, %44, %cst_21 {dimension_numbers = #tpu.dot_dimension_numbers<[1], [0], [0], [1], [0, 0, 1, 1], [], []>} : vector<16x64xbf16>, vector<64x32xbf16>, vector<16x32xf32> -> vector<16x32xf32>
    %c64 = arith.constant 64 : index
    %c0_22 = arith.constant 0 : index
    %46 = vector.load %arg3[%c64, %c0_22] : memref<192x384xbf16, #tpu.memory_space<vmem>>, vector<32x16xbf16>
    %47 = arith.truncf %45 : vector<16x32xf32> to vector<16x32xbf16>
    %cst_23 = arith.constant dense<0.000000e+00> : vector<16x16xf32>
    %48 = tpu.matmul %47, %46, %cst_23 {dimension_numbers = #tpu.dot_dimension_numbers<[1], [0], [0], [1], [0, 0, 1, 1], [], []>} : vector<16x32xbf16>, vector<32x16xbf16>, vector<16x16xf32> -> vector<16x16xf32>
    %49 = vector.broadcast %2 : vector<1x16xf32> to vector<16x16xf32>
    %50 = arith.addf %48, %49 : vector<16x16xf32>
    %51 = arith.negf %50 : vector<16x16xf32>
    %52 = math.exp %51 : vector<16x16xf32>
    %cst_24 = arith.constant 1.000000e+00 : f32
    %53 = vector.broadcast %cst_24 : f32 to vector<16x16xf32>
    %54 = arith.addf %53, %52 : vector<16x16xf32>
    %55 = arith.divf %53, %54 : vector<16x16xf32>
    %c96 = arith.constant 96 : index
    %c0_25 = arith.constant 0 : index
    %56 = vector.load %arg3[%c96, %c0_25] : memref<192x384xbf16, #tpu.memory_space<vmem>>, vector<16x384xbf16>
    %57 = arith.truncf %55 : vector<16x16xf32> to vector<16x16xbf16>
    %cst_26 = arith.constant dense<0.000000e+00> : vector<16x384xf32>
    %58 = tpu.matmul %57, %56, %cst_26 {dimension_numbers = #tpu.dot_dimension_numbers<[1], [0], [0], [1], [0, 0, 1, 1], [], []>} : vector<16x16xbf16>, vector<16x384xbf16>, vector<16x384xf32> -> vector<16x384xf32>
    %c112 = arith.constant 112 : index
    %c0_27 = arith.constant 0 : index
    %59 = vector.load %arg3[%c112, %c0_27] : memref<192x384xbf16, #tpu.memory_space<vmem>>, vector<16x384xbf16>
    %60 = arith.truncf %16 : vector<16x16xf32> to vector<16x16xbf16>
    %cst_28 = arith.constant dense<0.000000e+00> : vector<16x384xf32>
    %61 = tpu.matmul %60, %59, %cst_28 {dimension_numbers = #tpu.dot_dimension_numbers<[1], [0], [0], [1], [0, 0, 1, 1], [], []>} : vector<16x16xbf16>, vector<16x384xbf16>, vector<16x384xf32> -> vector<16x384xf32>
    %62 = arith.addf %58, %61 : vector<16x384xf32>
    %63 = vector.extract_strided_slice %62 {offsets = [0, 0], sizes = [16, 64], strides = [1, 1]} : vector<16x384xf32> to vector<16x64xf32>
    %64 = vector.broadcast %3 : vector<1x64xf32> to vector<16x64xf32>
    %65 = arith.addf %63, %64 : vector<16x64xf32>
    %66 = arith.negf %65 : vector<16x64xf32>
    %67 = math.exp %66 : vector<16x64xf32>
    %cst_29 = arith.constant 1.000000e+00 : f32
    %68 = vector.broadcast %cst_29 : f32 to vector<16x64xf32>
    %69 = arith.addf %68, %67 : vector<16x64xf32>
    %70 = arith.divf %68, %69 : vector<16x64xf32>
    %71 = vector.extract_strided_slice %62 {offsets = [0, 128], sizes = [16, 64], strides = [1, 1]} : vector<16x384xf32> to vector<16x64xf32>
    %72 = vector.broadcast %4 : vector<1x64xf32> to vector<16x64xf32>
    %73 = arith.addf %71, %72 : vector<16x64xf32>
    %74 = arith.negf %73 : vector<16x64xf32>
    %75 = math.exp %74 : vector<16x64xf32>
    %cst_30 = arith.constant 1.000000e+00 : f32
    %76 = vector.broadcast %cst_30 : f32 to vector<16x64xf32>
    %77 = arith.addf %76, %75 : vector<16x64xf32>
    %78 = arith.divf %76, %77 : vector<16x64xf32>
    %79 = vector.extract_strided_slice %62 {offsets = [0, 256], sizes = [16, 64], strides = [1, 1]} : vector<16x384xf32> to vector<16x64xf32>
    %80 = vector.broadcast %5 : vector<1x64xf32> to vector<16x64xf32>
    %81 = arith.addf %79, %80 : vector<16x64xf32>
    %82 = vector.broadcast %6 : vector<1x64xf32> to vector<16x64xf32>
    %83 = arith.mulf %70, %82 : vector<16x64xf32>
    %84 = arith.addf %81, %83 : vector<16x64xf32>
    %85 = math.tanh %84 : vector<16x64xf32>
    %cst_31 = arith.constant 1.000000e+00 : f32
    %86 = vector.broadcast %cst_31 : f32 to vector<16x64xf32>
    %87 = arith.subf %86, %78 : vector<16x64xf32>
    %88 = arith.mulf %87, %85 : vector<16x64xf32>
    %c128 = arith.constant 128 : index
    %c0_32 = arith.constant 0 : index
    %89 = vector.load %arg3[%c128, %c0_32] : memref<192x384xbf16, #tpu.memory_space<vmem>>, vector<64x128xbf16>
    %90 = arith.truncf %88 : vector<16x64xf32> to vector<16x64xbf16>
    %cst_33 = arith.constant dense<0.000000e+00> : vector<16x128xf32>
    %91 = tpu.matmul %90, %89, %cst_33 {dimension_numbers = #tpu.dot_dimension_numbers<[1], [0], [0], [1], [0, 0, 1, 1], [], []>} : vector<16x64xbf16>, vector<64x128xbf16>, vector<16x128xf32> -> vector<16x128xf32>
    %92 = vector.broadcast %7 : vector<1x128xf32> to vector<16x128xf32>
    %93 = arith.addf %91, %92 : vector<16x128xf32>
    %c0_34 = arith.constant 0 : index
    %c0_35 = arith.constant 0 : index
    %94 = vector.load %arg6[%c0_34, %c0_35] : memref<16x128xf32, #tpu.memory_space<vmem>>, vector<16x128xf32>
    tpu.vector_store %arg6[%c0_34, %c0_35], %93 {strides = array<i32>} : memref<16x128xf32, #tpu.memory_space<vmem>>, vector<16x128xf32>,
    return
  }
  func.func @transform_0(%arg0: i32) -> (i32, i32) {
    %c0_i32 = arith.constant 0 : i32
    %c0_i32_0 = arith.constant 0 : i32
    %c0_i32_1 = arith.constant 0 : i32
    return %c0_i32, %c0_i32_0 : i32, i32
  }
  func.func @transform_1(%arg0: i32) -> (i32, i32) {
    %c0_i32 = arith.constant 0 : i32
    %c0_i32_0 = arith.constant 0 : i32
    %c0_i32_1 = arith.constant 0 : i32
    return %c0_i32, %c0_i32_0 : i32, i32
  }
  func.func @transform_2(%arg0: i32) -> (i32, i32) {
    %c0_i32 = arith.constant 0 : i32
    %c0_i32_0 = arith.constant 0 : i32
    %c0_i32_1 = arith.constant 0 : i32
    return %c0_i32, %c0_i32_0 : i32, i32
  }
  func.func @transform_3(%arg0: i32) -> (i32, i32) {
    %c0_i32 = arith.constant 0 : i32
    %c0_i32_0 = arith.constant 0 : i32
    %c0_i32_1 = arith.constant 0 : i32
    return %c0_i32, %c0_i32_0 : i32, i32
  }
  func.func @transform_4(%arg0: i32) -> (i32, i32) {
    %c0_i32 = arith.constant 0 : i32
    %c0_i32_0 = arith.constant 0 : i32
    %c0_i32_1 = arith.constant 0 : i32
    return %c0_i32, %c0_i32_0 : i32, i32
  }
  func.func @transform_5(%arg0: i32) -> (i32, i32) {
    %c0_i32 = arith.constant 0 : i32
    %c0_i32_0 = arith.constant 0 : i32
    %c0_i32_1 = arith.constant 0 : i32
    return %c0_i32, %c0_i32_0 : i32, i32
  }
}

</mosaic_0001>

<llo_original>
// kernel: forward.1
$region0: #{forward.1}
  #allocation0 [shape = 'u32[]', space=smem, size = 0x4, offset = 0x4, fixed_abs, tag = 'smem constant byte address 0x4 - core index']
  #allocation1 [shape = 'u32[144,128]{1,0:T(1,128)}', space=vmem, size = 0x12000, scoped, tag = 'internal scratch']
  %s0 = inlined_call_operand.vmem [shape: f32[16,16], index: 0, kind: input, shape index: {}]
  %s1 = inlined_call_operand.vmem [shape: bf16[96,128], index: 1, kind: input, shape index: {}]
  %s2 = inlined_call_operand.vmem [shape: bf16[192,384], index: 2, kind: input, shape index: {}]
  %s3 = inlined_call_operand.vmem [shape: f32[8,128], index: 3, kind: input, shape index: {}]
  %s4 = inlined_call_operand.vmem [shape: f32[64,32], index: 4, kind: input, shape index: {}]
  %s5 = inlined_call_operand.vmem [shape: f32[16,128], index: 5, kind: output, shape index: {}]
  %s6 = sld [smem:[#allocation0]]
  $region30: #{forward.1} parent=0
    _
  %s8 = ssub.s32 1, %s6
  %s9 = scalar_select 0, %s8, %s6
  // Predicated region
  $region2: #{forward.1} parent=0 // pred_check
    _
  $region3: #{forward.1} parent=0 // pred_check_branch
    %11 = sbr.rel (0) target = $region5
  $region4: #{forward.1} parent=0 // pred_region
    _
  $region5: #{forward.1} parent=0 // pred_fallthru
    _
  // Predicated region
  $region6: #{forward.1} parent=0 // pred_check
    _
  $region7: #{forward.1} parent=0 // pred_check_branch
    %13 = sbr.rel (0) target = $region9
  $region8: #{forward.1} parent=0 // pred_region
    _
  $region9: #{forward.1} parent=0 // pred_fallthru
    _
  // Predicated region
  $region10: #{forward.1} parent=0 // pred_check
    _
  $region11: #{forward.1} parent=0 // pred_check_branch
    %15 = sbr.rel (0) target = $region13
  $region12: #{forward.1} parent=0 // pred_region
    _
  $region13: #{forward.1} parent=0 // pred_fallthru
    _
  // Predicated region
  $region14: #{forward.1} parent=0 // pred_check
    _
  $region15: #{forward.1} parent=0 // pred_check_branch
    %17 = sbr.rel (0) target = $region17
  $region16: #{forward.1} parent=0 // pred_region
    _
  $region17: #{forward.1} parent=0 // pred_fallthru
    _
  // Predicated region
  $region18: #{forward.1} parent=0 // pred_check
    _
  $region19: #{forward.1} parent=0 // pred_check_branch
    %19 = sbr.rel (0) target = $region21
  $region20: #{forward.1} parent=0 // pred_region
    _
  $region21: #{forward.1} parent=0 // pred_fallthru
    _
  %v21 = vld [vmem:[%s3] sm:$0xff]
  %v22 = vld [vmem:[%s0] sm:$0xff]
  %v23 = vld [vmem:[%s0 + $0x8] sm:$0xff]
  %v24 = vld [vmem:[%s2] sm:$0xf]
  %v25 = vld [vmem:[%s2 + $0xc] sm:$0xf]
  %v26 = vpack.c.bf16 %v23, %v22
  %v29 = vunpack.c.l.b16 %v24
  %v30 = vunpack.c.l.b16 %v25
  %v31 = vpack.c.b16 %v30, %v29
  %vm33 = vcmask 130048
  %v35 = vsel %vm33, %v26, 0
  %37 = vmatprep.subr.bf16.mxu0 0
  %38 = vmatpush1.bf16.msra.mxu0 %v31
  %39 = vmatprep.subr.bf16.mxu0 0
  %40 = vmatpush1.bf16.msra.mxu0 0
  %41 = vmatprep.subr.bf16.mxu0 0
  %42 = vmatpush1.bf16.msra.mxu0 0
  %43 = vmatprep.subr.bf16.mxu0 0
  %44 = vmatpush1.bf16.msra.mxu0 0
  %45 = vmatprep.subr.bf16.mxu0 0
  %46 = vmatpush1.bf16.msra.mxu0 0
  %47 = vmatprep.subr.bf16.mxu0 0
  %48 = vmatpush1.bf16.msra.mxu0 0
  %49 = vmatprep.subr.bf16.mxu0 0
  %50 = vmatpush1.bf16.msra.mxu0 0
  %51 = vmatprep.subr.bf16.mxu0 0
  %52 = vmatpush1.bf16.msra.mxu0 0
  %53 = vmatprep.subr.bf16.mxu0 0
  %54 = vmatpush1.bf16.msra.mxu0 0
  %55 = vmatprep.subr.bf16.mxu0 0
  %56 = vmatpush1.bf16.msra.mxu0 0
  %57 = vmatprep.subr.bf16.mxu0 0
  %58 = vmatpush1.bf16.msra.mxu0 0
  %59 = vmatprep.subr.bf16.mxu0 0
  %60 = vmatpush1.bf16.msra.mxu0 0
  %61 = vmatprep.subr.bf16.mxu0 0
  %62 = vmatpush1.bf16.msra.mxu0 0
  %63 = vmatprep.subr.bf16.mxu0 0
  %64 = vmatpush1.bf16.msra.mxu0 0
  %65 = vmatprep.subr.bf16.mxu0 0
  %66 = vmatpush1.bf16.msra.mxu0 0
  %67 = vmatprep.subr.bf16.mxu0 0
  %68 = vmatpush1.bf16.msra.mxu0 0
  %69 = vmatprep.mubr.bf16.mxu0 0
  %70 = vmatmul.mubr.bf16.gmra.mrb[0].mxu0 %v35
  %v71 = vpop.f32.mrb[0].mxu0
  %v72 = vadd.f32 0.0, %v71
  %v73 = vpop.f32.mrb[0].mxu0
  %v74 = vpop.f32.mrb[0].mxu0
  %v75 = vadd.f32 0.0, %v74
  %v76 = vpop.f32.mrb[0].mxu0
  %77 = vdwg.mxu0
  %v78 = vld [vmem:[%s1] sm:$0xf]
  %v79 = vld [vmem:[%s1 + $0x4] sm:$0xf]
  %v80 = vpack.c.bf16 %v75, %v72
  %v83 = vunpack.c.l.b16 %v78
  %v84 = vunpack.c.l.b16 %v79
  %v85 = vpack.c.b16 %v84, %v83
  %v87 = vsel %vm33, %v85, 0
  %89 = vmatprep.subr.bf16.mxu0 0
  %90 = vmatpush1.bf16.msra.mxu0 %v80
  %91 = vmatprep.subr.bf16.mxu0 0
  %92 = vmatpush1.bf16.msra.mxu0 0
  %93 = vmatprep.subr.bf16.mxu0 0
  %94 = vmatpush1.bf16.msra.mxu0 0
  %95 = vmatprep.subr.bf16.mxu0 0
  %96 = vmatpush1.bf16.msra.mxu0 0
  %97 = vmatprep.subr.bf16.mxu0 0
  %98 = vmatpush1.bf16.msra.mxu0 0
  %99 = vmatprep.subr.bf16.mxu0 0
  %100 = vmatpush1.bf16.msra.mxu0 0
  %101 = vmatprep.subr.bf16.mxu0 0
  %102 = vmatpush1.bf16.msra.mxu0 0
  %103 = vmatprep.subr.bf16.mxu0 0
  %104 = vmatpush1.bf16.msra.mxu0 0
  %105 = vmatprep.subr.bf16.mxu0 0
  %106 = vmatpush1.bf16.msra.mxu0 0
  %107 = vmatprep.subr.bf16.mxu0 0
  %108 = vmatpush1.bf16.msra.mxu0 0
  %109 = vmatprep.subr.bf16.mxu0 0
  %110 = vmatpush1.bf16.msra.mxu0 0
  %111 = vmatprep.subr.bf16.mxu0 0
  %112 = vmatpush1.bf16.msra.mxu0 0
  %113 = vmatprep.subr.bf16.mxu0 0
  %114 = vmatpush1.bf16.msra.mxu0 0
  %115 = vmatprep.subr.bf16.mxu0 0
  %116 = vmatpush1.bf16.msra.mxu0 0
  %117 = vmatprep.subr.bf16.mxu0 0
  %118 = vmatpush1.bf16.msra.mxu0 0
  %119 = vmatprep.subr.bf16.mxu0 0
  %120 = vmatpush1.bf16.msra.mxu0 0
  %121 = vmatprep.mubr.bf16.mxu0 0
  %122 = vmatmul.mubr.bf16.gmra.mrb[0].mxu0 %v87
  %v123 = vpop.f32.mrb[0].mxu0
  %v124 = vadd.f32 0.0, %v123
  %v125 = vpop.f32.mrb[0].mxu0
  %v126 = vpop.f32.mrb[0].mxu0
  %v127 = vadd.f32 0.0, %v126
  %v128 = vpop.f32.mrb[0].mxu0
  %129 = vdwg.mxu0
  %v130 = vmax.f32 %v124, 0.0
  %v131 = vmax.f32 %v127, 0.0
  %v132 = vld [vmem:[%s2 + $0x18] sm:$0xf]
  %v133 = vld [vmem:[%s2 + $0x24] sm:$0xf]
  %v134 = vpack.c.bf16 %v131, %v130
  %v137 = vunpack.c.l.b16 %v132
  %v138 = vunpack.c.l.b16 %v133
  %v139 = vpack.c.b16 %v138, %v137
  %v142 = vsel %vm33, %v134, 0
  %144 = vmatprep.subr.bf16.mxu0 0
  %145 = vmatpush1.bf16.msra.mxu0 %v139
  %146 = vmatprep.subr.bf16.mxu0 0
  %147 = vmatpush1.bf16.msra.mxu0 0
  %148 = vmatprep.subr.bf16.mxu0 0
  %149 = vmatpush1.bf16.msra.mxu0 0
  %150 = vmatprep.subr.bf16.mxu0 0
  %151 = vmatpush1.bf16.msra.mxu0 0
  %152 = vmatprep.subr.bf16.mxu0 0
  %153 = vmatpush1.bf16.msra.mxu0 0
  %154 = vmatprep.subr.bf16.mxu0 0
  %155 = vmatpush1.bf16.msra.mxu0 0
  %156 = vmatprep.subr.bf16.mxu0 0
  %157 = vmatpush1.bf16.msra.mxu0 0
  %158 = vmatprep.subr.bf16.mxu0 0
  %159 = vmatpush1.bf16.msra.mxu0 0
  %160 = vmatprep.subr.bf16.mxu0 0
  %161 = vmatpush1.bf16.msra.mxu0 0
  %162 = vmatprep.subr.bf16.mxu0 0
  %163 = vmatpush1.bf16.msra.mxu0 0
  %164 = vmatprep.subr.bf16.mxu0 0
  %165 = vmatpush1.bf16.msra.mxu0 0
  %166 = vmatprep.subr.bf16.mxu0 0
  %167 = vmatpush1.bf16.msra.mxu0 0
  %168 = vmatprep.subr.bf16.mxu0 0
  %169 = vmatpush1.bf16.msra.mxu0 0
  %170 = vmatprep.subr.bf16.mxu0 0
  %171 = vmatpush1.bf16.msra.mxu0 0
  %172 = vmatprep.subr.bf16.mxu0 0
  %173 = vmatpush1.bf16.msra.mxu0 0
  %174 = vmatprep.subr.bf16.mxu0 0
  %175 = vmatpush1.bf16.msra.mxu0 0
  %176 = vmatprep.mubr.bf16.mxu0 0
  %177 = vmatmul.mubr.bf16.gmra.mrb[0].mxu0 %v142
  %v178 = vpop.f32.mrb[0].mxu0
  %v179 = vadd.f32 0.0, %v178
  %v180 = vpop.f32.mrb[0].mxu0
  %v181 = vpop.f32.mrb[0].mxu0
  %v182 = vadd.f32 0.0, %v181
  %v183 = vpop.f32.mrb[0].mxu0
  %184 = vdwg.mxu0
  %187 = vrot.lane.b32.xlu0 %v179, 96
  %v188 = vpop.permute.xlu0 %187
  %189 = vrot.lane.b32.xlu0 %v182, 96
  %v190 = vpop.permute.xlu0 %189
  %v193 = vld [vmem:[%s1 + $0x8] sm:$0xf]
  %v194 = vld [vmem:[%s1 + $0xc] sm:$0xf]
  %v195 = vld [vmem:[%s1 + $0x10] sm:$0xf]
  %v196 = vld [vmem:[%s1 + $0x14] sm:$0xf]
  %v197 = vld [vmem:[%s1 + $0x18] sm:$0xf]
  %v198 = vld [vmem:[%s1 + $0x1c] sm:$0xf]
  %v199 = vld [vmem:[%s1 + $0x20] sm:$0xf]
  %v200 = vld [vmem:[%s1 + $0x24] sm:$0xf]
  %v201 = vpack.c.bf16 %v182, %v179
  %v202 = vpack.c.bf16 %v190, %v188
  %v203 = vld [vmem:[%s4] sm:$0xff]
  %v204 = vld [vmem:[%s4 + $0x8] sm:$0xff]
  %v205 = vld [vmem:[%s4 + $0x10] sm:$0xff]
  %v206 = vld [vmem:[%s4 + $0x18] sm:$0xff]
  %v207 = vld [vmem:[%s4 + $0x20] sm:$0xff]
  %v208 = vld [vmem:[%s4 + $0x28] sm:$0xff]
  %v209 = vld [vmem:[%s4 + $0x30] sm:$0xff]
  %v210 = vld [vmem:[%s4 + $0x38] sm:$0xff]
  %v219 = vunpack.c.l.b16 %v193
  %v220 = vunpack.c.l.b16 %v194
  %v221 = vunpack.c.l.b16 %v195
  %v222 = vunpack.c.l.b16 %v196
  %v223 = vunpack.c.l.b16 %v197
  %v224 = vunpack.c.l.b16 %v198
  %v225 = vunpack.c.l.b16 %v199
  %v226 = vunpack.c.l.b16 %v200
  %v227 = vpack.c.b16 %v220, %v219
  %v228 = vpack.c.b16 %v222, %v221
  %v229 = vpack.c.b16 %v224, %v223
  %v230 = vpack.c.b16 %v226, %v225
  %vm231 = vcmask 261120
  %v233 = vsel %vm231, %v227, 0
  %v236 = vsel %vm231, %v228, 0
  %v239 = vsel %vm231, %v229, 0
  %v242 = vsel %vm231, %v230, 0
  %244 = vmatprep.subr.bf16.mxu0 0
  %245 = vmatpush1.bf16.msra.mxu0 %v201
  %246 = vmatprep.subr.bf16.mxu0 0
  %247 = vmatpush1.bf16.msra.mxu0 %v202
  %248 = vmatprep.subr.bf16.mxu0 0
  %249 = vmatpush1.bf16.msra.mxu0 0
  %250 = vmatprep.subr.bf16.mxu0 0
  %251 = vmatpush1.bf16.msra.mxu0 0
  %252 = vmatprep.subr.bf16.mxu0 0
  %253 = vmatpush1.bf16.msra.mxu0 0
  %254 = vmatprep.subr.bf16.mxu0 0
  %255 = vmatpush1.bf16.msra.mxu0 0
  %256 = vmatprep.subr.bf16.mxu0 0
  %257 = vmatpush1.bf16.msra.mxu0 0
  %258 = vmatprep.subr.bf16.mxu0 0
  %259 = vmatpush1.bf16.msra.mxu0 0
  %260 = vmatprep.subr.bf16.mxu0 0
  %261 = vmatpush1.bf16.msra.mxu0 0
  %262 = vmatprep.subr.bf16.mxu0 0
  %263 = vmatpush1.bf16.msra.mxu0 0
  %264 = vmatprep.subr.bf16.mxu0 0
  %265 = vmatpush1.bf16.msra.mxu0 0
  %266 = vmatprep.subr.bf16.mxu0 0
  %267 = vmatpush1.bf16.msra.mxu0 0
  %268 = vmatprep.subr.bf16.mxu0 0
  %269 = vmatpush1.bf16.msra.mxu0 0
  %270 = vmatprep.subr.bf16.mxu0 0
  %271 = vmatpush1.bf16.msra.mxu0 0
  %272 = vmatprep.subr.bf16.mxu0 0
  %273 = vmatpush1.bf16.msra.mxu0 0
  %274 = vmatprep.subr.bf16.mxu0 0
  %275 = vmatpush1.bf16.msra.mxu0 0
  %276 = vmatprep.mubr.bf16.mxu0 0
  %277 = vmatmul.mubr.bf16.gmra.mrb[0].mxu0 %v233
  %v278 = vpop.f32.mrb[0].mxu0
  %v279 = vadd.f32 %v203, %v278
  %v280 = vpop.f32.mrb[0].mxu0
  %v281 = vpop.f32.mrb[0].mxu0
  %v282 = vadd.f32 %v204, %v281
  %v283 = vpop.f32.mrb[0].mxu0
  %284 = vmatprep.mubr.bf16.mxu0 0
  %285 = vmatmul.mubr.bf16.gmra.mrb[0].mxu0 %v236
  %v286 = vpop.f32.mrb[0].mxu0
  %v287 = vadd.f32 %v205, %v286
  %v288 = vpop.f32.mrb[0].mxu0
  %v289 = vpop.f32.mrb[0].mxu0
  %v290 = vadd.f32 %v206, %v289
  %v291 = vpop.f32.mrb[0].mxu0
  %292 = vmatprep.mubr.bf16.mxu0 0
  %293 = vmatmul.mubr.bf16.gmra.mrb[0].mxu0 %v239
  %v294 = vpop.f32.mrb[0].mxu0
  %v295 = vadd.f32 %v207, %v294
  %v296 = vpop.f32.mrb[0].mxu0
  %v297 = vpop.f32.mrb[0].mxu0
  %v298 = vadd.f32 %v208, %v297
  %v299 = vpop.f32.mrb[0].mxu0
  %300 = vmatprep.mubr.bf16.mxu0 0
  %301 = vmatmul.mubr.bf16.gmra.mrb[0].mxu0 %v242
  %v302 = vpop.f32.mrb[0].mxu0
  %v303 = vadd.f32 %v209, %v302
  %v304 = vpop.f32.mrb[0].mxu0
  %v305 = vpop.f32.mrb[0].mxu0
  %v306 = vadd.f32 %v210, %v305
  %v307 = vpop.f32.mrb[0].mxu0
  %308 = vdwg.mxu0
  %v309 = vxor.u32 %v279, 2147483648
  %v310 = vxor.u32 %v282, 2147483648
  %v311 = vxor.u32 %v287, 2147483648
  %v312 = vxor.u32 %v290, 2147483648
  %v313 = vxor.u32 %v295, 2147483648
  %v314 = vxor.u32 %v298, 2147483648
  %v315 = vxor.u32 %v303, 2147483648
  %v316 = vxor.u32 %v306, 2147483648
  %v317 = vmul.f32 %v309, 1.442695
  %v318 = vpow.pop %v317
  %v319 = vmul.f32 %v310, 1.442695
  %v320 = vpow.pop %v319
  %v321 = vmul.f32 %v311, 1.442695
  %v322 = vpow.pop %v321
  %v323 = vmul.f32 %v312, 1.442695
  %v324 = vpow.pop %v323
  %v325 = vmul.f32 %v313, 1.442695
  %v326 = vpow.pop %v325
  %v327 = vmul.f32 %v314, 1.442695
  %v328 = vpow.pop %v327
  %v329 = vmul.f32 %v315, 1.442695
  %v330 = vpow.pop %v329
  %v331 = vmul.f32 %v316, 1.442695
  %v332 = vpow.pop %v331
  %v333 = vadd.f32 %v318, 1.0
  %v334 = vadd.f32 %v320, 1.0
  %v335 = vadd.f32 %v322, 1.0
  %v336 = vadd.f32 %v324, 1.0
  %v337 = vadd.f32 %v326, 1.0
  %v338 = vadd.f32 %v328, 1.0
  %v339 = vadd.f32 %v330, 1.0
  %v340 = vadd.f32 %v332, 1.0
  %v341 = vrcp.pop %v333
  %v342 = vmul.f32 1.0, %v341
  %v343 = vrcp.pop %v334
  %v344 = vmul.f32 1.0, %v343
  %v345 = vrcp.pop %v335
  %v346 = vmul.f32 1.0, %v345
  %v347 = vrcp.pop %v336
  %v348 = vmul.f32 1.0, %v347
  %v349 = vrcp.pop %v337
  %v350 = vmul.f32 1.0, %v349
  %v351 = vrcp.pop %v338
  %v352 = vmul.f32 1.0, %v351
  %v353 = vrcp.pop %v339
  %v354 = vmul.f32 1.0, %v353
  %v355 = vrcp.pop %v340
  %v356 = vmul.f32 1.0, %v355
  %v357 = vld [vmem:[%s2 + $0x30] sm:$0xf]
  %v358 = vld [vmem:[%s2 + $0x3c] sm:$0xf]
  %v359 = vld [vmem:[%s2 + $0x48] sm:$0xf]
  %v360 = vld [vmem:[%s2 + $0x54] sm:$0xf]
  %v361 = vpack.c.bf16 %v344, %v342
  %v362 = vpack.c.bf16 %v348, %v346
  %v363 = vpack.c.bf16 %v352, %v350
  %v364 = vpack.c.bf16 %v356, %v354
  %v365 = vlaneseq
  %v366 = vshrl.u32 %v365, 7
  %v367 = vsub.s32 0, %v366
  %v368 = vrot.slane %v21, %v367
  %v373 = vunpack.c.l.b16 %v357
  %v374 = vunpack.c.l.b16 %v358
  %v375 = vunpack.c.l.b16 %v359
  %v376 = vunpack.c.l.b16 %v360
  %v377 = vpack.c.b16 %v374, %v373
  %v378 = vpack.c.b16 %v376, %v375
  %v382 = vsel %vm231, %v361, 0
  %v385 = vsel %vm231, %v362, 0
  %v388 = vsel %vm231, %v363, 0
  %v391 = vsel %vm231, %v364, 0
  %393 = vmatprep.subr.bf16.mxu0 0
  %394 = vmatpush1.bf16.msra.mxu0 %v377
  %395 = vmatprep.subr.bf16.mxu0 0
  %396 = vmatpush1.bf16.msra.mxu0 %v378
  %397 = vmatprep.subr.bf16.mxu0 0
  %398 = vmatpush1.bf16.msra.mxu0 0
  %399 = vmatprep.subr.bf16.mxu0 0
  %400 = vmatpush1.bf16.msra.mxu0 0
  %401 = vmatprep.subr.bf16.mxu0 0
  %402 = vmatpush1.bf16.msra.mxu0 0
  %403 = vmatprep.subr.bf16.mxu0 0
  %404 = vmatpush1.bf16.msra.mxu0 0
  %405 = vmatprep.subr.bf16.mxu0 0
  %406 = vmatpush1.bf16.msra.mxu0 0
  %407 = vmatprep.subr.bf16.mxu0 0
  %408 = vmatpush1.bf16.msra.mxu0 0
  %409 = vmatprep.subr.bf16.mxu0 0
  %410 = vmatpush1.bf16.msra.mxu0 0
  %411 = vmatprep.subr.bf16.mxu0 0
  %412 = vmatpush1.bf16.msra.mxu0 0
  %413 = vmatprep.subr.bf16.mxu0 0
  %414 = vmatpush1.bf16.msra.mxu0 0
  %415 = vmatprep.subr.bf16.mxu0 0
  %416 = vmatpush1.bf16.msra.mxu0 0
  %417 = vmatprep.subr.bf16.mxu0 0
  %418 = vmatpush1.bf16.msra.mxu0 0
  %419 = vmatprep.subr.bf16.mxu0 0
  %420 = vmatpush1.bf16.msra.mxu0 0
  %421 = vmatprep.subr.bf16.mxu0 0
  %422 = vmatpush1.bf16.msra.mxu0 0
  %423 = vmatprep.subr.bf16.mxu0 0
  %424 = vmatpush1.bf16.msra.mxu0 0
  %425 = vmatprep.mubr.bf16.mxu0 0
  %426 = vmatmul.mubr.bf16.gmra.mrb[0].mxu0 %v382
  %v427 = vpop.f32.mrb[0].mxu0
  %v428 = vadd.f32 %v368, %v427
  %v429 = vpop.f32.mrb[0].mxu0
  %v430 = vpop.f32.mrb[0].mxu0
  %v431 = vadd.f32 %v368, %v430
  %v432 = vpop.f32.mrb[0].mxu0
  %433 = vmatprep.mubr.bf16.mxu0 0
  %434 = vmatmul.mubr.bf16.gmra.mrb[0].mxu0 %v385
  %v435 = vpop.f32.mrb[0].mxu0
  %v436 = vadd.f32 %v368, %v435
  %v437 = vpop.f32.mrb[0].mxu0
  %v438 = vpop.f32.mrb[0].mxu0
  %v439 = vadd.f32 %v368, %v438
  %v440 = vpop.f32.mrb[0].mxu0
  %441 = vmatprep.mubr.bf16.mxu0 0
  %442 = vmatmul.mubr.bf16.gmra.mrb[0].mxu0 %v388
  %v443 = vpop.f32.mrb[0].mxu0
  %v444 = vadd.f32 %v368, %v443
  %v445 = vpop.f32.mrb[0].mxu0
  %v446 = vpop.f32.mrb[0].mxu0
  %v447 = vadd.f32 %v368, %v446
  %v448 = vpop.f32.mrb[0].mxu0
  %449 = vmatprep.mubr.bf16.mxu0 0
  %450 = vmatmul.mubr.bf16.gmra.mrb[0].mxu0 %v391
  %v451 = vpop.f32.mrb[0].mxu0
  %v452 = vadd.f32 %v368, %v451
  %v453 = vpop.f32.mrb[0].mxu0
  %v454 = vpop.f32.mrb[0].mxu0
  %v455 = vadd.f32 %v368, %v454
  %v456 = vpop.f32.mrb[0].mxu0
  %457 = vdwg.mxu0
  %v458 = vxor.u32 %v428, 2147483648
  %v459 = vxor.u32 %v431, 2147483648
  %v460 = vxor.u32 %v436, 2147483648
  %v461 = vxor.u32 %v439, 2147483648
  %v462 = vxor.u32 %v444, 2147483648
  %v463 = vxor.u32 %v447, 2147483648
  %v464 = vxor.u32 %v452, 2147483648
  %v465 = vxor.u32 %v455, 2147483648
  %v466 = vmul.f32 %v458, 1.442695
  %v467 = vpow.pop %v466
  %v468 = vmul.f32 %v459, 1.442695
  %v469 = vpow.pop %v468
  %v470 = vmul.f32 %v460, 1.442695
  %v471 = vpow.pop %v470
  %v472 = vmul.f32 %v461, 1.442695
  %v473 = vpow.pop %v472
  %v474 = vmul.f32 %v462, 1.442695
  %v475 = vpow.pop %v474
  %v476 = vmul.f32 %v463, 1.442695
  %v477 = vpow.pop %v476
  %v478 = vmul.f32 %v464, 1.442695
  %v479 = vpow.pop %v478
  %v480 = vmul.f32 %v465, 1.442695
  %v481 = vpow.pop %v480
  %v482 = vadd.f32 %v467, 1.0
  %v483 = vadd.f32 %v469, 1.0
  %v484 = vadd.f32 %v471, 1.0
  %v485 = vadd.f32 %v473, 1.0
  %v486 = vadd.f32 %v475, 1.0
  %v487 = vadd.f32 %v477, 1.0
  %v488 = vadd.f32 %v479, 1.0
  %v489 = vadd.f32 %v481, 1.0
  %v490 = vrcp.pop %v482
  %v491 = vmul.f32 1.0, %v490
  %v492 = vrcp.pop %v483
  %v493 = vmul.f32 1.0, %v492
  %v494 = vrcp.pop %v484
  %v495 = vmul.f32 1.0, %v494
  %v496 = vrcp.pop %v485
  %v497 = vmul.f32 1.0, %v496
  %v498 = vrcp.pop %v486
  %v499 = vmul.f32 1.0, %v498
  %v500 = vrcp.pop %v487
  %v501 = vmul.f32 1.0, %v500
  %v502 = vrcp.pop %v488
  %v503 = vmul.f32 1.0, %v502
  %v504 = vrcp.pop %v489
  %v505 = vmul.f32 1.0, %v504
  %v506 = vld [vmem:[%s1 + $0x28] sm:$0xf]
  %v507 = vld [vmem:[%s1 + $0x2c] sm:$0xf]
  %v508 = vpack.c.bf16 %v493, %v491
  %v509 = vpack.c.bf16 %v497, %v495
  %v510 = vpack.c.bf16 %v501, %v499
  %v511 = vpack.c.bf16 %v505, %v503
  %v514 = vunpack.c.l.b16 %v506
  %v515 = vunpack.c.l.b16 %v507
  %v516 = vpack.c.b16 %v515, %v514
  %vm517 = vcmask 523264
  %v519 = vsel %vm517, %v516, 0
  %521 = vmatprep.subr.bf16.mxu0 0
  %522 = vmatpush1.bf16.msra.mxu0 %v508
  %523 = vmatprep.subr.bf16.mxu0 0
  %524 = vmatpush1.bf16.msra.mxu0 %v509
  %525 = vmatprep.subr.bf16.mxu0 0
  %526 = vmatpush1.bf16.msra.mxu0 %v510
  %527 = vmatprep.subr.bf16.mxu0 0
  %528 = vmatpush1.bf16.msra.mxu0 %v511
  %529 = vmatprep.subr.bf16.mxu0 0
  %530 = vmatpush1.bf16.msra.mxu0 0
  %531 = vmatprep.subr.bf16.mxu0 0
  %532 = vmatpush1.bf16.msra.mxu0 0
  %533 = vmatprep.subr.bf16.mxu0 0
  %534 = vmatpush1.bf16.msra.mxu0 0
  %535 = vmatprep.subr.bf16.mxu0 0
  %536 = vmatpush1.bf16.msra.mxu0 0
  %537 = vmatprep.subr.bf16.mxu0 0
  %538 = vmatpush1.bf16.msra.mxu0 0
  %539 = vmatprep.subr.bf16.mxu0 0
  %540 = vmatpush1.bf16.msra.mxu0 0
  %541 = vmatprep.subr.bf16.mxu0 0
  %542 = vmatpush1.bf16.msra.mxu0 0
  %543 = vmatprep.subr.bf16.mxu0 0
  %544 = vmatpush1.bf16.msra.mxu0 0
  %545 = vmatprep.subr.bf16.mxu0 0
  %546 = vmatpush1.bf16.msra.mxu0 0
  %547 = vmatprep.subr.bf16.mxu0 0
  %548 = vmatpush1.bf16.msra.mxu0 0
  %549 = vmatprep.subr.bf16.mxu0 0
  %550 = vmatpush1.bf16.msra.mxu0 0
  %551 = vmatprep.subr.bf16.mxu0 0
  %552 = vmatpush1.bf16.msra.mxu0 0
  %553 = vmatprep.mubr.bf16.mxu0 0
  %554 = vmatmul.mubr.bf16.gmra.mrb[0].mxu0 %v519
  %v555 = vpop.f32.mrb[0].mxu0
  %v556 = vadd.f32 0.0, %v555
  %v557 = vpop.f32.mrb[0].mxu0
  %v558 = vpop.f32.mrb[0].mxu0
  %v559 = vadd.f32 0.0, %v558
  %v560 = vpop.f32.mrb[0].mxu0
  %561 = vdwg.mxu0
  %v562 = vld [vmem:[%s2 + $0x60] sm:$0xf]
  %v563 = vld [vmem:[%s2 + $0x6c] sm:$0xf]
  %v564 = vld [vmem:[%s2 + $0x78] sm:$0xf]
  %v565 = vld [vmem:[%s2 + $0x84] sm:$0xf]
  %v566 = vpack.c.bf16 %v559, %v556
  %v567 = vlaneseq
  %v568 = vshrl.u32 %v567, 7
  %v569 = vsub.s32 1, %v568
  %v570 = vrot.slane %v21, %v569
  %v575 = vunpack.c.l.b16 %v562
  %v576 = vunpack.c.l.b16 %v563
  %v577 = vunpack.c.l.b16 %v564
  %v578 = vunpack.c.l.b16 %v565
  %v579 = vpack.c.b16 %v576, %v575
  %v580 = vpack.c.b16 %v578, %v577
  %v584 = vsel %vm231, %v566, 0
  %586 = vmatprep.subr.bf16.mxu0 0
  %587 = vmatpush1.bf16.msra.mxu0 %v579
  %588 = vmatprep.subr.bf16.mxu0 0
  %589 = vmatpush1.bf16.msra.mxu0 %v580
  %590 = vmatprep.subr.bf16.mxu0 0
  %591 = vmatpush1.bf16.msra.mxu0 0
  %592 = vmatprep.subr.bf16.mxu0 0
  %593 = vmatpush1.bf16.msra.mxu0 0
  %594 = vmatprep.subr.bf16.mxu0 0
  %595 = vmatpush1.bf16.msra.mxu0 0
  %596 = vmatprep.subr.bf16.mxu0 0
  %597 = vmatpush1.bf16.msra.mxu0 0
  %598 = vmatprep.subr.bf16.mxu0 0
  %599 = vmatpush1.bf16.msra.mxu0 0
  %600 = vmatprep.subr.bf16.mxu0 0
  %601 = vmatpush1.bf16.msra.mxu0 0
  %602 = vmatprep.subr.bf16.mxu0 0
  %603 = vmatpush1.bf16.msra.mxu0 0
  %604 = vmatprep.subr.bf16.mxu0 0
  %605 = vmatpush1.bf16.msra.mxu0 0
  %606 = vmatprep.subr.bf16.mxu0 0
  %607 = vmatpush1.bf16.msra.mxu0 0
  %608 = vmatprep.subr.bf16.mxu0 0
  %609 = vmatpush1.bf16.msra.mxu0 0
  %610 = vmatprep.subr.bf16.mxu0 0
  %611 = vmatpush1.bf16.msra.mxu0 0
  %612 = vmatprep.subr.bf16.mxu0 0
  %613 = vmatpush1.bf16.msra.mxu0 0
  %614 = vmatprep.subr.bf16.mxu0 0
  %615 = vmatpush1.bf16.msra.mxu0 0
  %616 = vmatprep.subr.bf16.mxu0 0
  %617 = vmatpush1.bf16.msra.mxu0 0
  %618 = vmatprep.mubr.bf16.mxu0 0
  %619 = vmatmul.mubr.bf16.gmra.mrb[0].mxu0 %v584
  %v620 = vpop.f32.mrb[0].mxu0
  %v621 = vadd.f32 %v570, %v620
  %v622 = vpop.f32.mrb[0].mxu0
  %v623 = vpop.f32.mrb[0].mxu0
  %v624 = vadd.f32 %v570, %v623
  %v625 = vpop.f32.mrb[0].mxu0
  %626 = vdwg.mxu0
  %v627 = vxor.u32 %v621, 2147483648
  %v628 = vxor.u32 %v624, 2147483648
  %v629 = vmul.f32 %v627, 1.442695
  %v630 = vpow.pop %v629
  %v631 = vmul.f32 %v628, 1.442695
  %v632 = vpow.pop %v631
  %v633 = vadd.f32 %v630, 1.0
  %v634 = vadd.f32 %v632, 1.0
  %v635 = vrcp.pop %v633
  %v636 = vmul.f32 1.0, %v635
  %v637 = vrcp.pop %v634
  %v638 = vmul.f32 1.0, %v637
  %v639 = vld [vmem:[%s2 + $0x90] sm:$0xff]
  %v640 = vld [vmem:[%s2 + $0x98] sm:$0xf]
  %v641 = vld [vmem:[%s2 + $0x9c] sm:$0xff]
  %v642 = vld [vmem:[%s2 + $0xa4] sm:$0xf]
  %v643 = vpack.c.bf16 %v638, %v636
  %v644 = vld [vmem:[%s2 + $0xa8] sm:$0xff]
  %v645 = vld [vmem:[%s2 + $0xb0] sm:$0xf]
  %v646 = vld [vmem:[%s2 + $0xb4] sm:$0xff]
  %v647 = vld [vmem:[%s2 + $0xbc] sm:$0xf]
  %v652 = vunpack.c.l.b16 %v644
  %v653 = vunpack.c.h.b16 %v644
  %v654 = vunpack.c.l.b16 %v645
  %v655 = vunpack.c.l.b16 %v646
  %v656 = vunpack.c.h.b16 %v646
  %v657 = vunpack.c.l.b16 %v647
  %v658 = vpack.c.b16 %v655, %v652
  %v659 = vpack.c.b16 %v656, %v653
  %v660 = vpack.c.b16 %v657, %v654
  %664 = vmatprep.subr.bf16.mxu0 %v659
  %665 = vmatpush1.bf16.msra.mxu0 %v658
  %666 = vmatprep.subr.bf16.mxu0 0
  %667 = vmatpush1.bf16.msra.mxu0 0
  %668 = vmatprep.subr.bf16.mxu0 0
  %669 = vmatpush1.bf16.msra.mxu0 0
  %670 = vmatprep.subr.bf16.mxu0 0
  %671 = vmatpush1.bf16.msra.mxu0 0
  %672 = vmatprep.subr.bf16.mxu0 0
  %673 = vmatpush1.bf16.msra.mxu0 0
  %674 = vmatprep.subr.bf16.mxu0 0
  %675 = vmatpush1.bf16.msra.mxu0 0
  %676 = vmatprep.subr.bf16.mxu0 0
  %677 = vmatpush1.bf16.msra.mxu0 0
  %678 = vmatprep.subr.bf16.mxu0 0
  %679 = vmatpush1.bf16.msra.mxu0 0
  %680 = vmatprep.subr.bf16.mxu0 0
  %681 = vmatpush1.bf16.msra.mxu0 0
  %682 = vmatprep.subr.bf16.mxu0 0
  %683 = vmatpush1.bf16.msra.mxu0 0
  %684 = vmatprep.subr.bf16.mxu0 0
  %685 = vmatpush1.bf16.msra.mxu0 0
  %686 = vmatprep.subr.bf16.mxu0 0
  %687 = vmatpush1.bf16.msra.mxu0 0
  %688 = vmatprep.subr.bf16.mxu0 0
  %689 = vmatpush1.bf16.msra.mxu0 0
  %690 = vmatprep.subr.bf16.mxu0 0
  %691 = vmatpush1.bf16.msra.mxu0 0
  %692 = vmatprep.subr.bf16.mxu0 0
  %693 = vmatpush1.bf16.msra.mxu0 0
  %694 = vmatprep.subr.bf16.mxu0 0
  %695 = vmatpush1.bf16.msra.mxu0 0
  %696 = vmatprep.mubr.bf16.mxu0 0
  %697 = vmatmul.mubr.bf16.gmra.mrb[0].mxu0 %v142
  %v698 = vpop.f32.mrb[0].mxu0
  %v699 = vadd.f32 0.0, %v698
  %v700 = vpop.f32.mrb[0].mxu0
  %v701 = vadd.f32 0.0, %v700
  %v702 = vpop.f32.mrb[0].mxu0
  %v703 = vadd.f32 0.0, %v702
  %v704 = vpop.f32.mrb[0].mxu0
  %v705 = vadd.f32 0.0, %v704
  %706 = vdwg.mxu0
  %707 = vmatprep.subr.bf16.mxu0 0
  %708 = vmatpush1.bf16.msra.mxu0 %v660
  %709 = vmatprep.subr.bf16.mxu0 0
  %710 = vmatpush1.bf16.msra.mxu0 0
  %711 = vmatprep.subr.bf16.mxu0 0
  %712 = vmatpush1.bf16.msra.mxu0 0
  %713 = vmatprep.subr.bf16.mxu0 0
  %714 = vmatpush1.bf16.msra.mxu0 0
  %715 = vmatprep.subr.bf16.mxu0 0
  %716 = vmatpush1.bf16.msra.mxu0 0
  %717 = vmatprep.subr.bf16.mxu0 0
  %718 = vmatpush1.bf16.msra.mxu0 0
  %719 = vmatprep.subr.bf16.mxu0 0
  %720 = vmatpush1.bf16.msra.mxu0 0
  %721 = vmatprep.subr.bf16.mxu0 0
  %722 = vmatpush1.bf16.msra.mxu0 0
  %723 = vmatprep.subr.bf16.mxu0 0
  %724 = vmatpush1.bf16.msra.mxu0 0
  %725 = vmatprep.subr.bf16.mxu0 0
  %726 = vmatpush1.bf16.msra.mxu0 0
  %727 = vmatprep.subr.bf16.mxu0 0
  %728 = vmatpush1.bf16.msra.mxu0 0
  %729 = vmatprep.subr.bf16.mxu0 0
  %730 = vmatpush1.bf16.msra.mxu0 0
  %731 = vmatprep.subr.bf16.mxu0 0
  %732 = vmatpush1.bf16.msra.mxu0 0
  %733 = vmatprep.subr.bf16.mxu0 0
  %734 = vmatpush1.bf16.msra.mxu0 0
  %735 = vmatprep.subr.bf16.mxu0 0
  %736 = vmatpush1.bf16.msra.mxu0 0
  %737 = vmatprep.subr.bf16.mxu0 0
  %738 = vmatpush1.bf16.msra.mxu0 0
  %739 = vmatprep.mubr.bf16.mxu0 0
  %740 = vmatmul.mubr.bf16.gmra.mrb[0].mxu0 %v142
  %v741 = vpop.f32.mrb[0].mxu0
  %v742 = vadd.f32 0.0, %v741
  %v743 = vpop.f32.mrb[0].mxu0
  %v744 = vpop.f32.mrb[0].mxu0
  %v745 = vadd.f32 0.0, %v744
  %v746 = vpop.f32.mrb[0].mxu0
  %747 = vdwg.mxu0
  %v752 = vunpack.c.l.b16 %v639
  %v753 = vunpack.c.h.b16 %v639
  %v754 = vunpack.c.l.b16 %v640
  %v755 = vunpack.c.l.b16 %v641
  %v756 = vunpack.c.h.b16 %v641
  %v757 = vunpack.c.l.b16 %v642
  %v758 = vpack.c.b16 %v755, %v752
  %v759 = vpack.c.b16 %v756, %v753
  %v760 = vpack.c.b16 %v757, %v754
  %v765 = vsel %vm33, %v643, 0
  %767 = vmatprep.subr.bf16.mxu0 %v759
  %768 = vmatpush1.bf16.msra.mxu0 %v758
  %769 = vmatprep.subr.bf16.mxu0 0
  %770 = vmatpush1.bf16.msra.mxu0 0
  %771 = vmatprep.subr.bf16.mxu0 0
  %772 = vmatpush1.bf16.msra.mxu0 0
  %773 = vmatprep.subr.bf16.mxu0 0
  %774 = vmatpush1.bf16.msra.mxu0 0
  %775 = vmatprep.subr.bf16.mxu0 0
  %776 = vmatpush1.bf16.msra.mxu0 0
  %777 = vmatprep.subr.bf16.mxu0 0
  %778 = vmatpush1.bf16.msra.mxu0 0
  %779 = vmatprep.subr.bf16.mxu0 0
  %780 = vmatpush1.bf16.msra.mxu0 0
  %781 = vmatprep.subr.bf16.mxu0 0
  %782 = vmatpush1.bf16.msra.mxu0 0
  %783 = vmatprep.subr.bf16.mxu0 0
  %784 = vmatpush1.bf16.msra.mxu0 0
  %785 = vmatprep.subr.bf16.mxu0 0
  %786 = vmatpush1.bf16.msra.mxu0 0
  %787 = vmatprep.subr.bf16.mxu0 0
  %788 = vmatpush1.bf16.msra.mxu0 0
  %789 = vmatprep.subr.bf16.mxu0 0
  %790 = vmatpush1.bf16.msra.mxu0 0
  %791 = vmatprep.subr.bf16.mxu0 0
  %792 = vmatpush1.bf16.msra.mxu0 0
  %793 = vmatprep.subr.bf16.mxu0 0
  %794 = vmatpush1.bf16.msra.mxu0 0
  %795 = vmatprep.subr.bf16.mxu0 0
  %796 = vmatpush1.bf16.msra.mxu0 0
  %797 = vmatprep.subr.bf16.mxu0 0
  %798 = vmatpush1.bf16.msra.mxu0 0
  %799 = vmatprep.mubr.bf16.mxu0 0
  %800 = vmatmul.mubr.bf16.gmra.mrb[0].mxu0 %v765
  %v801 = vpop.f32.mrb[0].mxu0
  %v802 = vadd.f32 %v699, %v801
  %v803 = vpop.f32.mrb[0].mxu0
  %v804 = vadd.f32 %v701, %v803
  %v805 = vpop.f32.mrb[0].mxu0
  %v806 = vadd.f32 %v703, %v805
  %v807 = vpop.f32.mrb[0].mxu0
  %v808 = vadd.f32 %v705, %v807
  %809 = vdwg.mxu0
  %810 = vmatprep.subr.bf16.mxu0 0
  %811 = vmatpush1.bf16.msra.mxu0 %v760
  %812 = vmatprep.subr.bf16.mxu0 0
  %813 = vmatpush1.bf16.msra.mxu0 0
  %814 = vmatprep.subr.bf16.mxu0 0
  %815 = vmatpush1.bf16.msra.mxu0 0
  %816 = vmatprep.subr.bf16.mxu0 0
  %817 = vmatpush1.bf16.msra.mxu0 0
  %818 = vmatprep.subr.bf16.mxu0 0
  %819 = vmatpush1.bf16.msra.mxu0 0
  %820 = vmatprep.subr.bf16.mxu0 0
  %821 = vmatpush1.bf16.msra.mxu0 0
  %822 = vmatprep.subr.bf16.mxu0 0
  %823 = vmatpush1.bf16.msra.mxu0 0
  %824 = vmatprep.subr.bf16.mxu0 0
  %825 = vmatpush1.bf16.msra.mxu0 0
  %826 = vmatprep.subr.bf16.mxu0 0
  %827 = vmatpush1.bf16.msra.mxu0 0
  %828 = vmatprep.subr.bf16.mxu0 0
  %829 = vmatpush1.bf16.msra.mxu0 0
  %830 = vmatprep.subr.bf16.mxu0 0
  %831 = vmatpush1.bf16.msra.mxu0 0
  %832 = vmatprep.subr.bf16.mxu0 0
  %833 = vmatpush1.bf16.msra.mxu0 0
  %834 = vmatprep.subr.bf16.mxu0 0
  %835 = vmatpush1.bf16.msra.mxu0 0
  %836 = vmatprep.subr.bf16.mxu0 0
  %837 = vmatpush1.bf16.msra.mxu0 0
  %838 = vmatprep.subr.bf16.mxu0 0
  %839 = vmatpush1.bf16.msra.mxu0 0
  %840 = vmatprep.subr.bf16.mxu0 0
  %841 = vmatpush1.bf16.msra.mxu0 0
  %842 = vmatprep.mubr.bf16.mxu0 0
  %843 = vmatmul.mubr.bf16.gmra.mrb[0].mxu0 %v765
  %v844 = vpop.f32.mrb[0].mxu0
  %v845 = vadd.f32 %v742, %v844
  %v846 = vpop.f32.mrb[0].mxu0
  %v847 = vpop.f32.mrb[0].mxu0
  %v848 = vadd.f32 %v745, %v847
  %v849 = vpop.f32.mrb[0].mxu0
  %850 = vdwg.mxu0
  %v851 = vlaneseq
  %v852 = vshrl.u32 %v851, 7
  %v853 = vsub.s32 2, %v852
  %v854 = vrot.slane %v21, %v853
  %v855 = vadd.f32 %v802, %v854
  %v856 = vadd.f32 %v806, %v854
  %v857 = vxor.u32 %v855, 2147483648
  %v858 = vxor.u32 %v856, 2147483648
  %v859 = vmul.f32 %v857, 1.442695
  %v860 = vpow.pop %v859
  %v861 = vmul.f32 %v858, 1.442695
  %v862 = vpow.pop %v861
  %v863 = vadd.f32 %v860, 1.0
  %v864 = vadd.f32 %v862, 1.0
  %v865 = vrcp.pop %v863
  %v866 = vmul.f32 1.0, %v865
  %v867 = vrcp.pop %v864
  %v868 = vmul.f32 1.0, %v867
  %v869 = vlaneseq
  %v870 = vshrl.u32 %v869, 7
  %v871 = vsub.s32 3, %v870
  %v872 = vrot.slane %v21, %v871
  %v873 = vadd.f32 %v804, %v872
  %v874 = vadd.f32 %v808, %v872
  %v875 = vxor.u32 %v873, 2147483648
  %v876 = vxor.u32 %v874, 2147483648
  %v877 = vmul.f32 %v875, 1.442695
  %v878 = vpow.pop %v877
  %v879 = vmul.f32 %v876, 1.442695
  %v880 = vpow.pop %v879
  %v881 = vadd.f32 %v878, 1.0
  %v882 = vadd.f32 %v880, 1.0
  %v883 = vrcp.pop %v881
  %v884 = vmul.f32 1.0, %v883
  %v885 = vrcp.pop %v882
  %v886 = vmul.f32 1.0, %v885
  %v887 = vlaneseq
  %v888 = vshrl.u32 %v887, 7
  %v889 = vsub.s32 4, %v888
  %v890 = vrot.slane %v21, %v889
  %v891 = vadd.f32 %v845, %v890
  %v892 = vadd.f32 %v848, %v890
  %v893 = vlaneseq
  %v894 = vshrl.u32 %v893, 7
  %v895 = vsub.s32 5, %v894
  %v896 = vrot.slane %v21, %v895
  %v897 = vmul.f32 %v866, %v896
  %v898 = vmul.f32 %v868, %v896
  %v899 = vadd.f32 %v891, %v897
  %v900 = vadd.f32 %v892, %v898
  %v901 = vtanh.pop %v899
  %v902 = vtanh.pop %v900
  %v903 = vsub.f32 1.0, %v884
  %v904 = vsub.f32 1.0, %v886
  %v905 = vmul.f32 %v903, %v901
  %v906 = vmul.f32 %v904, %v902
  %v907 = vld [vmem:[%s2 + $0xc0] sm:$0xf]
  %v908 = vld [vmem:[%s2 + $0xcc] sm:$0xf]
  %v909 = vld [vmem:[%s2 + $0xd8] sm:$0xf]
  %v910 = vld [vmem:[%s2 + $0xe4] sm:$0xf]
  %v911 = vld [vmem:[%s2 + $0xf0] sm:$0xf]
  %v912 = vld [vmem:[%s2 + $0xfc] sm:$0xf]
  %v913 = vld [vmem:[%s2 + $0x108] sm:$0xf]
  %v914 = vld [vmem:[%s2 + $0x114] sm:$0xf]
  %v915 = vpack.c.bf16 %v906, %v905
  %v916 = vlaneseq
  %v917 = vshrl.u32 %v916, 7
  %v918 = vsub.s32 6, %v917
  %v919 = vrot.slane %v21, %v918
  %v928 = vunpack.c.l.b16 %v907
  %v929 = vunpack.c.l.b16 %v908
  %v930 = vunpack.c.l.b16 %v909
  %v931 = vunpack.c.l.b16 %v910
  %v932 = vunpack.c.l.b16 %v911
  %v933 = vunpack.c.l.b16 %v912
  %v934 = vunpack.c.l.b16 %v913
  %v935 = vunpack.c.l.b16 %v914
  %v936 = vpack.c.b16 %v929, %v928
  %v937 = vpack.c.b16 %v931, %v930
  %v938 = vpack.c.b16 %v933, %v932
  %v939 = vpack.c.b16 %v935, %v934
  %v945 = vsel %vm517, %v915, 0
  %947 = vmatprep.subr.bf16.mxu0 0
  %948 = vmatpush1.bf16.msra.mxu0 %v936
  %949 = vmatprep.subr.bf16.mxu0 0
  %950 = vmatpush1.bf16.msra.mxu0 %v937
  %951 = vmatprep.subr.bf16.mxu0 0
  %952 = vmatpush1.bf16.msra.mxu0 %v938
  %953 = vmatprep.subr.bf16.mxu0 0
  %954 = vmatpush1.bf16.msra.mxu0 %v939
  %955 = vmatprep.subr.bf16.mxu0 0
  %956 = vmatpush1.bf16.msra.mxu0 0
  %957 = vmatprep.subr.bf16.mxu0 0
  %958 = vmatpush1.bf16.msra.mxu0 0
  %959 = vmatprep.subr.bf16.mxu0 0
  %960 = vmatpush1.bf16.msra.mxu0 0
  %961 = vmatprep.subr.bf16.mxu0 0
  %962 = vmatpush1.bf16.msra.mxu0 0
  %963 = vmatprep.subr.bf16.mxu0 0
  %964 = vmatpush1.bf16.msra.mxu0 0
  %965 = vmatprep.subr.bf16.mxu0 0
  %966 = vmatpush1.bf16.msra.mxu0 0
  %967 = vmatprep.subr.bf16.mxu0 0
  %968 = vmatpush1.bf16.msra.mxu0 0
  %969 = vmatprep.subr.bf16.mxu0 0
  %970 = vmatpush1.bf16.msra.mxu0 0
  %971 = vmatprep.subr.bf16.mxu0 0
  %972 = vmatpush1.bf16.msra.mxu0 0
  %973 = vmatprep.subr.bf16.mxu0 0
  %974 = vmatpush1.bf16.msra.mxu0 0
  %975 = vmatprep.subr.bf16.mxu0 0
  %976 = vmatpush1.bf16.msra.mxu0 0
  %977 = vmatprep.subr.bf16.mxu0 0
  %978 = vmatpush1.bf16.msra.mxu0 0
  %979 = vmatprep.mubr.bf16.mxu0 0
  %980 = vmatmul.mubr.bf16.gmra.mrb[0].mxu0 %v945
  %v981 = vpop.f32.mrb[0].mxu0
  %v982 = vadd.f32 %v919, %v981
  %v983 = vpop.f32.mrb[0].mxu0
  %v984 = vpop.f32.mrb[0].mxu0
  %v985 = vadd.f32 %v919, %v984
  %v986 = vpop.f32.mrb[0].mxu0
  %987 = vdwg.mxu0
  %988 = vst [vmem:[%s5] sm:$0xff] %v982
  %989 = vst [vmem:[%s5 + $0x8] sm:$0xff] %v985
  // Predicated region
  $region22: #{forward.1} parent=0 // pred_check
    _
  $region23: #{forward.1} parent=0 // pred_check_branch
    %991 = sbr.rel (0) target = $region25
  $region24: #{forward.1} parent=0 // pred_region
    _
  $region25: #{forward.1} parent=0 // pred_fallthru
    _
  // Predicated region
  $region26: #{forward.1} parent=0 // pred_check
    _
  $region27: #{forward.1} parent=0 // pred_check_branch
    %993 = sbr.rel (0) target = $region29
  $region28: #{forward.1} parent=0 // pred_region
    _
  $region29: #{forward.1} parent=0 // pred_fallthru
    _

</llo_original>
